<compile_context>
chip_gen: v7x
topology: tpu7x:2x2x1
jax: 0.10.0
libtpu: 0.0.40
codegen_flags: <defaults>
</compile_context>

<pallas_src>
import jax
import jax.numpy as jnp
from jax.experimental import pallas as pl
from jax.experimental.pallas import tpu as pltpu


def _pooler_kernel(x_ref, wt_ref, b_ref, out_ref):
    # x_ref : (block_b, H)        CLS activations (storage dtype -> MXU directly)
    # wt_ref: (H, block_n)        pre-transposed weight (storage dtype)
    # b_ref : (1, block_n)        bias, f32
    # out_ref: (block_b, block_n)
    y = jnp.dot(x_ref[...], wt_ref[...], preferred_element_type=jnp.float32)
    out_ref[...] = jnp.tanh(y + b_ref[...]).astype(out_ref.dtype)


def _pick_block_n(hidden, w_itemsize, budget_bytes=16 * 1024 * 1024):
    # Keep the full weight resident (the pipeliner double-buffers it) if it
    # fits the budget; otherwise tile the output-feature dim in 128-lane steps.
    if 2 * hidden * hidden * w_itemsize <= budget_bytes:
        return hidden
    bn = (budget_bytes // (2 * hidden * w_itemsize)) // 128 * 128
    return int(max(128, bn))


def bert_pooler(hidden_states, weight, bias, *, block_b=None):
    """BERTPooler forward: tanh(hidden_states[:, 0] @ weight.T + bias).

    hidden_states: [B, L, H]
    weight:        [H, H]  (PyTorch nn.Linear layout: (out_features, in_features))
    bias:          [H]
    returns:       [B, H]
    """
    B, L, H = hidden_states.shape
    assert weight.shape == (H, H)
    assert bias.shape == (H,)

    x = hidden_states[:, 0, :]                        # [B, H] CLS tokens

    # One-time wrapper-side weight prep: match the activation dtype (down-cast
    # f32 -> bf16 when activations are bf16 -> halves the dominant weight DMA,
    # keeps the in-kernel dot single-dtype) and pre-transpose so the kernel
    # contracts x[K] with W_t[K, N] without a per-step relayout.
    w_t = weight.astype(hidden_states.dtype).T        # [H_in, H_out]
    b2 = bias.reshape(1, H).astype(jnp.float32)       # f32 epilogue operand

    # --- tiling -----------------------------------------------------------
    block_n = _pick_block_n(H, jnp.dtype(w_t.dtype).itemsize)
    if block_b is None:
        block_b = B if B <= 1024 else 1024
    else:
        block_b = min(int(block_b), B)
        if block_b < B:
            block_b = max(8, (block_b // 8) * 8)      # keep (8,128)-legal tiling
    grid_n = pl.cdiv(H, block_n)
    grid_b = pl.cdiv(B, block_b)

    if grid_n > 1:
        # Weight-tiled path (large H / v7x): split the N axis across cores so
        # total weight HBM traffic stays at 1x; batch loop runs inside.
        dim_sem = ("parallel", "arbitrary")
    else:
        # Weight fully resident: parallelize over batch tiles.
        dim_sem = ("arbitrary", "parallel")

    return pl.pallas_call(
        _pooler_kernel,
        out_shape=jax.ShapeDtypeStruct((B, H), hidden_states.dtype),
        grid_spec=pltpu.PrefetchScalarGridSpec(
            num_scalar_prefetch=0,
            grid=(grid_n, grid_b),                    # N outer, batch inner
            in_specs=[
                # CLS activations: one batch tile per inner step.
                pl.BlockSpec((block_b, H), lambda n, b: (b, 0)),
                # Pre-transposed weight: constant across the inner batch loop
                # -> DMA'd once per N tile, VMEM-resident afterwards.
                pl.BlockSpec((H, block_n), lambda n, b: (0, n)),
                # Bias tile (f32).
                pl.BlockSpec((1, block_n), lambda n, b: (0, n)),
            ],
            out_specs=pl.BlockSpec((block_b, block_n), lambda n, b: (b, n)),
        ),
        compiler_params=pltpu.CompilerParams(dimension_semantics=dim_sem),
    )(x, w_t, b2)


if __name__ == "__main__":
    # Small shapes consistent with the module: batch=2, seq=8, hidden=32.
    B, L, H = 2, 8, 32

    key = jax.random.PRNGKey(0)
    kx, kw, kb = jax.random.split(key, 3)
    hidden_states = jax.random.normal(kx, (B, L, H), dtype=jnp.float32)
    weight = jax.random.normal(kw, (H, H), dtype=jnp.float32) * 0.1
    bias = jax.random.normal(kb, (H,), dtype=jnp.float32) * 0.1

    ref = jnp.tanh(hidden_states[:, 0, :] @ weight.T + bias)

    # f32 path (matches the PyTorch module bit-for-bit up to accumulation order).
    out = bert_pooler(hidden_states, weight, bias)
    jax.block_until_ready(out)
    assert out.shape == (B, H)
    assert jnp.allclose(out, ref, atol=1e-5, rtol=1e-5), (
        f"max abs err = {float(jnp.max(jnp.abs(out - ref)))}"
    )

    # bf16 activation path: weight down-cast once in the wrapper, native MXU bf16.
    out_bf16 = bert_pooler(hidden_states.astype(jnp.bfloat16), weight, bias)
    jax.block_until_ready(out_bf16)
    assert out_bf16.dtype == jnp.bfloat16
    assert jnp.allclose(out_bf16.astype(jnp.float32), ref, atol=5e-2, rtol=5e-2), (
        f"max abs err (bf16) = {float(jnp.max(jnp.abs(out_bf16.astype(jnp.float32) - ref)))}"
    )

    print("KERNEL_OK")
</pallas_src>

<mosaic_0001>
module attributes {stable_mosaic.version = 11 : i64} {
  func.func @_pooler_kernel(%arg0: i32, %arg1: i32, %arg2: memref<2x32xf32, #tpu.memory_space<vmem>>, %arg3: memref<32x32xf32, #tpu.memory_space<vmem>>, %arg4: memref<1x32xf32, #tpu.memory_space<vmem>>, %arg5: memref<2x32xf32, #tpu.memory_space<vmem>>) attributes {dimension_semantics = [#tpu.dimension_semantics<arbitrary>, #tpu.dimension_semantics<parallel>], iteration_bounds = array<i64: 1, 1>, scalar_prefetch = 0 : i64, scratch_operands = 0 : i64, tpu.core_type = #tpu.core_type<tc>, window_params = [{transform_indices = @transform_0, window_bounds = array<i64: 2, 32>}, {transform_indices = @transform_1, window_bounds = array<i64: 32, 32>}, {transform_indices = @transform_2, window_bounds = array<i64: 1, 32>}, {transform_indices = @transform_3, window_bounds = array<i64: 2, 32>}]} {
    %c0 = arith.constant 0 : index
    %c0_0 = arith.constant 0 : index
    %0 = vector.load %arg2[%c0, %c0_0] : memref<2x32xf32, #tpu.memory_space<vmem>>, vector<2x32xf32>
    %c0_1 = arith.constant 0 : index
    %c0_2 = arith.constant 0 : index
    %1 = vector.load %arg3[%c0_1, %c0_2] : memref<32x32xf32, #tpu.memory_space<vmem>>, vector<32x32xf32>
    %cst = arith.constant dense<0.000000e+00> : vector<2x32xf32>
    %2 = tpu.matmul %0, %1, %cst {dimension_numbers = #tpu.dot_dimension_numbers<[1], [0], [0], [1], [0, 0, 1, 1], [], []>} : vector<2x32xf32>, vector<32x32xf32>, vector<2x32xf32> -> vector<2x32xf32>
    %c0_3 = arith.constant 0 : index
    %c0_4 = arith.constant 0 : index
    %3 = vector.load %arg4[%c0_3, %c0_4] : memref<1x32xf32, #tpu.memory_space<vmem>>, vector<1x32xf32>
    %4 = vector.broadcast %3 : vector<1x32xf32> to vector<2x32xf32>
    %5 = arith.addf %2, %4 : vector<2x32xf32>
    %6 = math.tanh %5 : vector<2x32xf32>
    %c0_5 = arith.constant 0 : index
    %c0_6 = arith.constant 0 : index
    %7 = vector.load %arg5[%c0_5, %c0_6] : memref<2x32xf32, #tpu.memory_space<vmem>>, vector<2x32xf32>
    tpu.vector_store %arg5[%c0_5, %c0_6], %6 {strides = array<i32>} : memref<2x32xf32, #tpu.memory_space<vmem>>, vector<2x32xf32>,
    return
  }
  func.func @transform_0(%arg0: i32, %arg1: i32) -> (i32, i32) {
    %c0_i32 = arith.constant 0 : i32
    %c0_i32_0 = arith.constant 0 : i32
    return %arg1, %c0_i32 : i32, i32
  }
  func.func @transform_1(%arg0: i32, %arg1: i32) -> (i32, i32) {
    %c0_i32 = arith.constant 0 : i32
    %c0_i32_0 = arith.constant 0 : i32
    return %c0_i32, %arg0 : i32, i32
  }
  func.func @transform_2(%arg0: i32, %arg1: i32) -> (i32, i32) {
    %c0_i32 = arith.constant 0 : i32
    %c0_i32_0 = arith.constant 0 : i32
    return %c0_i32, %arg0 : i32, i32
  }
  func.func @transform_3(%arg0: i32, %arg1: i32) -> (i32, i32) {
    %c0_i32 = arith.constant 0 : i32
    return %arg1, %arg0 : i32, i32
  }
}

</mosaic_0001>

<llo_original>
// kernel: tpu_custom_call.1
$region0: #{tpu_custom_call.1}
  #allocation0 [shape = 'u32[]', space=smem, size = 0x4, offset = 0x4, fixed_abs, tag = 'smem constant byte address 0x4 - core index']
  #allocation1 [shape = 'u32[144,128]{1,0:T(1,128)}', space=vmem, size = 0x12000, scoped, tag = 'internal scratch']
  %s0 = inlined_call_operand.hbm [shape: f32[2,32], index: 0, kind: input, shape index: {}]
  %s1 = inlined_call_operand.hbm [shape: f32[32,32], index: 1, kind: input, shape index: {}]
  %s2 = inlined_call_operand.vmem [shape: f32[1,32], index: 2, kind: input, shape index: {}]
  %s3 = inlined_call_operand.hbm [shape: f32[2,32], index: 3, kind: output, shape index: {}]
  %s4 = sld [smem:[#allocation0]]
  $region30: #{tpu_custom_call.1} parent=0
    _
  %s6 = ssub.s32 1, %s4
  %s7 = scalar_select 0, %s6, %s4
  $region1: #{tpu_custom_call.1} parent=0
    #allocation2 [shape = 'u8[1024]{0}', space=vmem, size = 0x400, scoped, tag = 'input window, operand 0, single buffered']
    #allocation3 [shape = 's32[1]{0}', space=sflag, size = 0x4, scoped, tag = 'scoped memory for tpu_custom_call.1']
    #allocation4 [shape = 's32[1]{0}', space=sflag, size = 0x4, scoped, tag = 'scoped memory for tpu_custom_call.1']
    #allocation5 [shape = 'u8[16384]{0}', space=vmem, size = 0x4000, scoped, tag = 'input window, operand 1, single buffered']
    #allocation6 [shape = 's32[1]{0}', space=sflag, size = 0x4, scoped, tag = 'scoped memory for tpu_custom_call.1']
    #allocation7 [shape = 'u8[1024]{0}', space=vmem, size = 0x400, scoped, tag = 'output window, operand 0, single buffered']
    %8 = vsyncpa [#allocation3], 0
    %9 = vsyncpa [#allocation6], 0
    %10 = vsyncpa [#allocation4], 0
    // Predicated region
    $region2: #{tpu_custom_call.1} parent=1 // pred_check
      _
    $region3: #{tpu_custom_call.1} parent=1 // pred_check_branch
      %12 = sbr.rel (0) target = $region5
    $region4: #{tpu_custom_call.1} parent=1 // pred_region
      %s14 = ssub.s32 32, 32
      %15 = vsyncadd [#allocation3], %s14
      %s17 = sshll.u32 [#allocation2], 4
      %s18 = int_to_ptr.vmem [resolvable:$true] %s17
      %20 = dma.hbm_to_vmem [thread:$0]  %s0, 32, %s18, [#allocation3]
    $region5: #{tpu_custom_call.1} parent=1 // pred_fallthru
      _
    // Predicated region
    $region6: #{tpu_custom_call.1} parent=1 // pred_check
      _
    $region7: #{tpu_custom_call.1} parent=1 // pred_check_branch
      %22 = sbr.rel (0) target = $region9
    $region8: #{tpu_custom_call.1} parent=1 // pred_region
      %s24 = ssub.s32 512, 512
      %25 = vsyncadd [#allocation6], %s24
      %s26 = sshll.u32 [#allocation5], 4
      %s27 = int_to_ptr.vmem [resolvable:$true] %s26
      %32 = dma.hbm_to_vmem [thread:$0]  %s1, 512, %s27, [#allocation6], 128, 128, 8
    $region9: #{tpu_custom_call.1} parent=1 // pred_fallthru
      _
    // Predicated region
    $region10: #{tpu_custom_call.1} parent=1 // pred_check
      _
    $region11: #{tpu_custom_call.1} parent=1 // pred_check_branch
      %34 = sbr.rel (0) target = $region13
    $region12: #{tpu_custom_call.1} parent=1 // pred_region
      _
    $region13: #{tpu_custom_call.1} parent=1 // pred_fallthru
      _
    // Predicated region
    $region14: #{tpu_custom_call.1} parent=1 // pred_check
      _
    $region15: #{tpu_custom_call.1} parent=1 // pred_check_branch
      %36 = sbr.rel (0) target = $region17
    $region16: #{tpu_custom_call.1} parent=1 // pred_region
      %37 = dma.done [#allocation3], 32
    $region17: #{tpu_custom_call.1} parent=1 // pred_fallthru
      _
    // Predicated region
    $region18: #{tpu_custom_call.1} parent=1 // pred_check
      _
    $region19: #{tpu_custom_call.1} parent=1 // pred_check_branch
      %39 = sbr.rel (0) target = $region21
    $region20: #{tpu_custom_call.1} parent=1 // pred_region
      %40 = dma.done [#allocation6], 512
    $region21: #{tpu_custom_call.1} parent=1 // pred_fallthru
      _
    %v41 = vld [vmem:[#allocation2] sm:$0x3]
    %v42 = vld [vmem:[#allocation5] sm:$0xff]
    %v43 = vld [vmem:[#allocation5 + $0x8] sm:$0xff]
    %v44 = vld [vmem:[#allocation5 + $0x10] sm:$0xff]
    %v45 = vld [vmem:[#allocation5 + $0x18] sm:$0xff]
    %v46 = vld [vmem:[%s2] sm:$0x1]
    %v48 = vlaneseq
    %v49 = vshrl.u32 %v48, 7
    %v50 = vsub.s32 0, %v49
    %v51 = vrot.slane %v46, %v50
    %vm53 = vcmask 261120
    %v55 = vsel %vm53, %v41, 0
    %57 = vmatprep.subr.mxu0 0.0
    %58 = vmatpush1.msra.mxu0 %v42
    %59 = vmatprep.subr.mxu0 0.0
    %60 = vmatpush1.msra.mxu0 %v43
    %61 = vmatprep.subr.mxu0 0.0
    %62 = vmatpush1.msra.mxu0 %v44
    %63 = vmatprep.subr.mxu0 0.0
    %64 = vmatpush1.msra.mxu0 %v45
    %65 = vmatprep.subr.mxu0 0.0
    %66 = vmatpush1.msra.mxu0 0.0
    %67 = vmatprep.subr.mxu0 0.0
    %68 = vmatpush1.msra.mxu0 0.0
    %69 = vmatprep.subr.mxu0 0.0
    %70 = vmatpush1.msra.mxu0 0.0
    %71 = vmatprep.subr.mxu0 0.0
    %72 = vmatpush1.msra.mxu0 0.0
    %73 = vmatprep.subr.mxu0 0.0
    %74 = vmatpush1.msra.mxu0 0.0
    %75 = vmatprep.subr.mxu0 0.0
    %76 = vmatpush1.msra.mxu0 0.0
    %77 = vmatprep.subr.mxu0 0.0
    %78 = vmatpush1.msra.mxu0 0.0
    %79 = vmatprep.subr.mxu0 0.0
    %80 = vmatpush1.msra.mxu0 0.0
    %81 = vmatprep.subr.mxu0 0.0
    %82 = vmatpush1.msra.mxu0 0.0
    %83 = vmatprep.subr.mxu0 0.0
    %84 = vmatpush1.msra.mxu0 0.0
    %85 = vmatprep.subr.mxu0 0.0
    %86 = vmatpush1.msra.mxu0 0.0
    %87 = vmatprep.subr.mxu0 0.0
    %88 = vmatpush1.msra.mxu0 0.0
    %89 = vmatprep.subr.mxu0 0.0
    %90 = vmatpush1.msra.mxu0 0.0
    %91 = vmatprep.subr.mxu0 0.0
    %92 = vmatpush1.msra.mxu0 0.0
    %93 = vmatprep.subr.mxu0 0.0
    %94 = vmatpush1.msra.mxu0 0.0
    %95 = vmatprep.subr.mxu0 0.0
    %96 = vmatpush1.msra.mxu0 0.0
    %97 = vmatprep.subr.mxu0 0.0
    %98 = vmatpush1.msra.mxu0 0.0
    %99 = vmatprep.subr.mxu0 0.0
    %100 = vmatpush1.msra.mxu0 0.0
    %101 = vmatprep.subr.mxu0 0.0
    %102 = vmatpush1.msra.mxu0 0.0
    %103 = vmatprep.subr.mxu0 0.0
    %104 = vmatpush1.msra.mxu0 0.0
    %105 = vmatprep.subr.mxu0 0.0
    %106 = vmatpush1.msra.mxu0 0.0
    %107 = vmatprep.subr.mxu0 0.0
    %108 = vmatpush1.msra.mxu0 0.0
    %109 = vmatprep.subr.mxu0 0.0
    %110 = vmatpush1.msra.mxu0 0.0
    %111 = vmatprep.subr.mxu0 0.0
    %112 = vmatpush1.msra.mxu0 0.0
    %113 = vmatprep.subr.mxu0 0.0
    %114 = vmatpush1.msra.mxu0 0.0
    %115 = vmatprep.subr.mxu0 0.0
    %116 = vmatpush1.msra.mxu0 0.0
    %117 = vmatprep.subr.mxu0 0.0
    %118 = vmatpush1.msra.mxu0 0.0
    %119 = vmatprep.subr.mxu0 0.0
    %120 = vmatpush1.msra.mxu0 0.0
    %121 = vmatprep.mubr.f32.mxu0 0.0
    %122 = vmatmul.mubr.f32.gmra.mrb[0].mxu0 %v55
    %v123 = vpop.f32.mrb[0].mxu0
    %v124 = vadd.f32 %v51, %v123
    %v125 = vpop.f32.mrb[0].mxu0
    %126 = vdwg.mxu0
    %v127 = vtanh.pop %v124
    %vm128 = vcmask 254976
    %129 = vst.msk [vmem:[#allocation7] sm:$0x3] %vm128, %v127
    // Predicated region
    $region22: #{tpu_custom_call.1} parent=1 // pred_check
      _
    $region23: #{tpu_custom_call.1} parent=1 // pred_check_branch
      %131 = sbr.rel (0) target = $region25
    $region24: #{tpu_custom_call.1} parent=1 // pred_region
      %s133 = ssub.s32 32, 32
      %134 = vsyncadd [#allocation4], %s133
      %s136 = sshll.u32 [#allocation7], 4
      %s137 = int_to_ptr.vmem [resolvable:$true] %s136
      %139 = dma.vmem_to_hbm [thread:$0]  %s137, 32, %s3, [#allocation4]
    $region25: #{tpu_custom_call.1} parent=1 // pred_fallthru
      _
    // Predicated region
    $region26: #{tpu_custom_call.1} parent=1 // pred_check
      _
    $region27: #{tpu_custom_call.1} parent=1 // pred_check_branch
      %141 = sbr.rel (0) target = $region29
    $region28: #{tpu_custom_call.1} parent=1 // pred_region
      %142 = dma.done [#allocation4], 32
    $region29: #{tpu_custom_call.1} parent=1 // pred_fallthru
      _
    %143 = vsyncpa [#allocation3], 1
    %144 = vsyncpa [#allocation6], 1
    %145 = vsyncpa [#allocation4], 1

</llo_original>
